<compile_context>
chip_gen: v7x
topology: tpu7x:2x2x1
jax: 0.10.0
libtpu: 0.0.40
codegen_flags: <defaults>
</compile_context>

<pallas_src>
import jax
import jax.numpy as jnp
from jax.experimental import pallas as pl
from jax.experimental.pallas import tpu as pltpu


def _round_up(x, m):
    return ((x + m - 1) // m) * m


def twolayer_kernel(x_ref, w1_ref, b1_ref, w2_ref, b2_ref, o_ref):
    # x_ref:  (TB, Dp)   f32  flattened input tile (zero-padded rows/cols if needed)
    # w1_ref: (Dp, Hp)   bf16 first linear weight, (in, out) layout, zero-padded
    # b1_ref: (1,  Hp)   f32  first bias (zero-padded)
    # w2_ref: (Hp, Cp)   bf16 second linear weight, (in, out) layout, zero-padded
    # b2_ref: (1,  Cp)   f32  second bias (-1e9 in padded class lanes)
    # o_ref:  (TB, C)    f32  softmax probabilities, real classes only

    # Cast x to bf16 in-kernel (keeps the HBM x path to a single f32 read).
    x = x_ref[...].astype(jnp.bfloat16)

    # Linear 1 (bf16 MXU, f32 accumulate) + Sigmoid via a single tanh EUP push.
    h = jnp.dot(x, w1_ref[...], preferred_element_type=jnp.float32) + b1_ref[...]
    h = 0.5 * jnp.tanh(0.5 * h) + 0.5

    # Linear 2 (bf16 MXU, f32 accumulate).
    logits = jnp.dot(h.astype(jnp.bfloat16), w2_ref[...],
                     preferred_element_type=jnp.float32) + b2_ref[...]

    # Softmax over the (padded) class axis. Padded lanes have logit ~= -1e9,
    # so exp(logit - max) underflows to 0 and carries no probability mass.
    m = jnp.max(logits, axis=-1, keepdims=True)
    e = jnp.exp(logits - m)
    denom = jnp.sum(e, axis=-1, keepdims=True)
    probs = e * pl.reciprocal(denom, approx=True)

    # Store only the real class columns (narrow output array -> far less write DMA).
    o_ref[...] = probs[:, : o_ref.shape[1]].astype(o_ref.dtype)


def twolayer_net(x_nchw, w1, b1, w2, b2, *, batch_tile=None):
    """Forward pass of TwoLayerNet.

    x_nchw: (B, ...) float32, flattened row-major like torch .view(B, -1)
    w1: (hidden, input_dim), b1: (hidden,)         -- PyTorch Linear layout
    w2: (num_classes, hidden), b2: (num_classes,)
    returns: (B, num_classes) softmax probabilities, float32
    """
    B = x_nchw.shape[0]
    x_flat = x_nchw.reshape(B, -1).astype(jnp.float32)   # == x.view(x.size(0), -1)
    D = x_flat.shape[1]
    H = w1.shape[0]
    C = w2.shape[0]

    # Lane-dense padded sizes for the compute dims.
    D_pad = _round_up(D, 128)
    H_pad = _round_up(H, 128)
    C_pad = _round_up(C, 128)

    # Batch tile: multiple of 256, capped at 2048 rows and by a VMEM budget for the
    # double-buffered f32 x tile (~8 MiB), so the same shape works on v5e/v6e/v7x.
    if batch_tile is None:
        tb = min(2048, _round_up(B, 256))
    else:
        tb = _round_up(batch_tile, 256)
    x_tile_budget = 8 * 1024 * 1024
    tb_cap = max(256, ((x_tile_budget // (2 * D_pad * 4)) // 256) * 256)
    tb = min(tb, tb_cap)
    B_pad = _round_up(B, tb)

    # Only pad x when actually needed; in the aligned case x goes straight to the
    # kernel with no extra HBM pass.
    if (B_pad, D_pad) != (B, D):
        xp = jnp.pad(x_flat, ((0, B_pad - B), (0, D_pad - D)))
    else:
        xp = x_flat

    # Weights presented as (in, out) so the kernel does plain x @ W; zero-padded to
    # lane-dense shapes (exact through sigmoid + matmul), bf16 for the MXU.
    w1t = jnp.pad(w1.T.astype(jnp.bfloat16), ((0, D_pad - D), (0, H_pad - H)))
    b1r = jnp.pad(b1.astype(jnp.float32), (0, H_pad - H)).reshape(1, H_pad)
    w2t = jnp.pad(w2.T.astype(jnp.bfloat16), ((0, H_pad - H), (0, C_pad - C)))
    # Padded class lanes get a huge negative bias -> softmax mass exactly 0.
    b2r = jnp.pad(b2.astype(jnp.float32), (0, C_pad - C),
                  constant_values=-1e9).reshape(1, C_pad)

    grid = (B_pad // tb,)

    out = pl.pallas_call(
        twolayer_kernel,
        out_shape=jax.ShapeDtypeStruct((B_pad, C), jnp.float32),
        grid_spec=pltpu.PrefetchScalarGridSpec(
            num_scalar_prefetch=0,
            grid=grid,
            in_specs=[
                pl.BlockSpec((tb, D_pad), lambda i: (i, 0)),     # x tile over batch
                pl.BlockSpec((D_pad, H_pad), lambda i: (0, 0)),  # full W1 (resident)
                pl.BlockSpec((1, H_pad), lambda i: (0, 0)),      # full b1
                pl.BlockSpec((H_pad, C_pad), lambda i: (0, 0)),  # full W2 (resident)
                pl.BlockSpec((1, C_pad), lambda i: (0, 0)),      # full b2
            ],
            out_specs=pl.BlockSpec((tb, C), lambda i: (i, 0)),   # narrow, real classes
        ),
        compiler_params=pltpu.CompilerParams(
            dimension_semantics=("parallel",),
            vmem_limit_bytes=32 * 1024 * 1024),
    )(xp, w1t, b1r, w2t, b2r)

    return out if B_pad == B else out[:B]


if __name__ == "__main__":
    # Small, deterministic synthetic setup.
    B, Cin, Hh, Ww = 8, 4, 8, 8            # input x: (8, 4, 8, 8) -> input_dim = 256
    input_dim = Cin * Hh * Ww
    hidden_size = 32
    num_classes = 10

    key = jax.random.PRNGKey(0)
    kx, kw1, kb1, kw2, kb2 = jax.random.split(key, 5)

    x = jax.random.normal(kx, (B, Cin, Hh, Ww), dtype=jnp.float32)

    # PyTorch-style Linear init: U(-1/sqrt(fan_in), 1/sqrt(fan_in)), deterministic here.
    lim1 = 1.0 / jnp.sqrt(float(input_dim))
    w1 = jax.random.uniform(kw1, (hidden_size, input_dim), jnp.float32, -lim1, lim1)
    b1 = jax.random.uniform(kb1, (hidden_size,), jnp.float32, -lim1, lim1)
    lim2 = 1.0 / jnp.sqrt(float(hidden_size))
    w2 = jax.random.uniform(kw2, (num_classes, hidden_size), jnp.float32, -lim2, lim2)
    b2 = jax.random.uniform(kb2, (num_classes,), jnp.float32, -lim2, lim2)

    out = twolayer_net(x, w1, b1, w2, b2)
    out = jax.block_until_ready(out)

    # Pure-JAX reference with the same bf16 casts the kernel uses (f32 accumulation),
    # so only summation order / sigmoid form / softmax approx-rcp differ.
    xf = x.reshape(B, -1)
    xb_ref = xf.astype(jnp.bfloat16).astype(jnp.float32)
    w1_ref = w1.astype(jnp.bfloat16).astype(jnp.float32)
    w2_ref = w2.astype(jnp.bfloat16).astype(jnp.float32)
    h_ref = jax.nn.sigmoid(xb_ref @ w1_ref.T + b1)
    h_ref = h_ref.astype(jnp.bfloat16).astype(jnp.float32)
    ref = jax.nn.softmax(h_ref @ w2_ref.T + b2, axis=1)

    # Also a fully-f32 reference as a sanity bound.
    ref_f32 = jax.nn.softmax(jax.nn.sigmoid(xf @ w1.T + b1) @ w2.T + b2, axis=1)

    assert out.shape == (B, num_classes)
    assert jnp.allclose(out, ref, atol=5e-3, rtol=0), "mismatch vs bf16-cast reference"
    assert jnp.allclose(out, ref_f32, atol=2e-2, rtol=0), "mismatch vs f32 reference"
    assert jnp.allclose(jnp.sum(out, axis=1), 1.0, atol=5e-3), "softmax rows must sum to 1"

    print("KERNEL_OK")
</pallas_src>

<mosaic_0001>
module attributes {stable_mosaic.version = 11 : i64} {
  func.func @twolayer_kernel(%arg0: i32, %arg1: memref<256x256xf32, #tpu.memory_space<vmem>>, %arg2: memref<256x128xbf16, #tpu.memory_space<vmem>>, %arg3: memref<1x128xf32, #tpu.memory_space<vmem>>, %arg4: memref<128x128xbf16, #tpu.memory_space<vmem>>, %arg5: memref<1x128xf32, #tpu.memory_space<vmem>>, %arg6: memref<256x10xf32, #tpu.memory_space<vmem>>) attributes {dimension_semantics = [#tpu.dimension_semantics<parallel>], iteration_bounds = array<i64: 1>, scalar_prefetch = 0 : i64, scratch_operands = 0 : i64, tpu.core_type = #tpu.core_type<tc>, window_params = [{transform_indices = @transform_0, window_bounds = array<i64: 256, 256>}, {pipeline_mode = #tpu.pipeline_mode<synchronous>, transform_indices = @transform_1, window_bounds = array<i64: 256, 128>}, {pipeline_mode = #tpu.pipeline_mode<synchronous>, transform_indices = @transform_2, window_bounds = array<i64: 1, 128>}, {pipeline_mode = #tpu.pipeline_mode<synchronous>, transform_indices = @transform_3, window_bounds = array<i64: 128, 128>}, {pipeline_mode = #tpu.pipeline_mode<synchronous>, transform_indices = @transform_4, window_bounds = array<i64: 1, 128>}, {transform_indices = @transform_5, window_bounds = array<i64: 256, 10>}]} {
    %c0 = arith.constant 0 : index
    %c0_0 = arith.constant 0 : index
    %0 = vector.load %arg1[%c0, %c0_0] : memref<256x256xf32, #tpu.memory_space<vmem>>, vector<256x256xf32>
    %1 = arith.truncf %0 : vector<256x256xf32> to vector<256x256xbf16>
    %c0_1 = arith.constant 0 : index
    %c0_2 = arith.constant 0 : index
    %2 = vector.load %arg2[%c0_1, %c0_2] : memref<256x128xbf16, #tpu.memory_space<vmem>>, vector<256x128xbf16>
    %cst = arith.constant dense<0.000000e+00> : vector<256x128xf32>
    %3 = tpu.matmul %1, %2, %cst {dimension_numbers = #tpu.dot_dimension_numbers<[1], [0], [0], [1], [0, 0, 1, 1], [], []>} : vector<256x256xbf16>, vector<256x128xbf16>, vector<256x128xf32> -> vector<256x128xf32>
    %c0_3 = arith.constant 0 : index
    %c0_4 = arith.constant 0 : index
    %4 = vector.load %arg3[%c0_3, %c0_4] : memref<1x128xf32, #tpu.memory_space<vmem>>, vector<1x128xf32>
    %5 = vector.broadcast %4 : vector<1x128xf32> to vector<256x128xf32>
    %6 = arith.addf %3, %5 : vector<256x128xf32>
    %cst_5 = arith.constant 5.000000e-01 : f32
    %7 = vector.broadcast %cst_5 : f32 to vector<256x128xf32>
    %8 = arith.mulf %7, %6 : vector<256x128xf32>
    %9 = math.tanh %8 : vector<256x128xf32>
    %cst_6 = arith.constant 5.000000e-01 : f32
    %10 = vector.broadcast %cst_6 : f32 to vector<256x128xf32>
    %11 = arith.mulf %10, %9 : vector<256x128xf32>
    %cst_7 = arith.constant 5.000000e-01 : f32
    %12 = vector.broadcast %cst_7 : f32 to vector<256x128xf32>
    %13 = arith.addf %11, %12 : vector<256x128xf32>
    %14 = arith.truncf %13 : vector<256x128xf32> to vector<256x128xbf16>
    %c0_8 = arith.constant 0 : index
    %c0_9 = arith.constant 0 : index
    %15 = vector.load %arg4[%c0_8, %c0_9] : memref<128x128xbf16, #tpu.memory_space<vmem>>, vector<128x128xbf16>
    %cst_10 = arith.constant dense<0.000000e+00> : vector<256x128xf32>
    %16 = tpu.matmul %14, %15, %cst_10 {dimension_numbers = #tpu.dot_dimension_numbers<[1], [0], [0], [1], [0, 0, 1, 1], [], []>} : vector<256x128xbf16>, vector<128x128xbf16>, vector<256x128xf32> -> vector<256x128xf32>
    %c0_11 = arith.constant 0 : index
    %c0_12 = arith.constant 0 : index
    %17 = vector.load %arg5[%c0_11, %c0_12] : memref<1x128xf32, #tpu.memory_space<vmem>>, vector<1x128xf32>
    %18 = vector.broadcast %17 : vector<1x128xf32> to vector<256x128xf32>
    %19 = arith.addf %16, %18 : vector<256x128xf32>
    %cst_13 = arith.constant dense<0xFF800000> : vector<256xf32>
    %20 = vector.multi_reduction <maximumf>, %19, %cst_13 [1] : vector<256x128xf32> to vector<256xf32>
    %21 = vector.shape_cast %20 : vector<256xf32> to vector<256x1xf32>
    %22 = vector.broadcast %21 : vector<256x1xf32> to vector<256x128xf32>
    %23 = arith.subf %19, %22 : vector<256x128xf32>
    %24 = math.exp %23 : vector<256x128xf32>
    %cst_14 = arith.constant dense<0.000000e+00> : vector<256xf32>
    %25 = vector.multi_reduction <add>, %24, %cst_14 [1] : vector<256x128xf32> to vector<256xf32>
    %26 = vector.shape_cast %25 : vector<256xf32> to vector<256x1xf32>
    %27 = tpu.reciprocal %26 {approx = true} : vector<256x1xf32> -> vector<256x1xf32>
    %28 = vector.broadcast %27 : vector<256x1xf32> to vector<256x128xf32>
    %29 = arith.mulf %24, %28 : vector<256x128xf32>
    %30 = vector.extract_strided_slice %29 {offsets = [0, 0], sizes = [256, 10], strides = [1, 1]} : vector<256x128xf32> to vector<256x10xf32>
    %c0_15 = arith.constant 0 : index
    %c0_16 = arith.constant 0 : index
    %31 = vector.load %arg6[%c0_15, %c0_16] : memref<256x10xf32, #tpu.memory_space<vmem>>, vector<256x10xf32>
    tpu.vector_store %arg6[%c0_15, %c0_16], %30 {strides = array<i32>} : memref<256x10xf32, #tpu.memory_space<vmem>>, vector<256x10xf32>,
    return
  }
  func.func @transform_0(%arg0: i32) -> (i32, i32) {
    %c0_i32 = arith.constant 0 : i32
    %c0_i32_0 = arith.constant 0 : i32
    return %arg0, %c0_i32 : i32, i32
  }
  func.func @transform_1(%arg0: i32) -> (i32, i32) {
    %c0_i32 = arith.constant 0 : i32
    %c0_i32_0 = arith.constant 0 : i32
    %c0_i32_1 = arith.constant 0 : i32
    return %c0_i32, %c0_i32_0 : i32, i32
  }
  func.func @transform_2(%arg0: i32) -> (i32, i32) {
    %c0_i32 = arith.constant 0 : i32
    %c0_i32_0 = arith.constant 0 : i32
    %c0_i32_1 = arith.constant 0 : i32
    return %c0_i32, %c0_i32_0 : i32, i32
  }
  func.func @transform_3(%arg0: i32) -> (i32, i32) {
    %c0_i32 = arith.constant 0 : i32
    %c0_i32_0 = arith.constant 0 : i32
    %c0_i32_1 = arith.constant 0 : i32
    return %c0_i32, %c0_i32_0 : i32, i32
  }
  func.func @transform_4(%arg0: i32) -> (i32, i32) {
    %c0_i32 = arith.constant 0 : i32
    %c0_i32_0 = arith.constant 0 : i32
    %c0_i32_1 = arith.constant 0 : i32
    return %c0_i32, %c0_i32_0 : i32, i32
  }
  func.func @transform_5(%arg0: i32) -> (i32, i32) {
    %c0_i32 = arith.constant 0 : i32
    %c0_i32_0 = arith.constant 0 : i32
    return %arg0, %c0_i32 : i32, i32
  }
}

</mosaic_0001>

<llo_original>
// kernel: tpu_custom_call.1
$region0: #{tpu_custom_call.1}
  #allocation0 [shape = 'u32[]', space=smem, size = 0x4, offset = 0x4, fixed_abs, tag = 'smem constant byte address 0x4 - core index']
  #allocation1 [shape = 'u32[144,128]{1,0:T(1,128)}', space=vmem, size = 0x12000, scoped, tag = 'internal scratch']
  %s0 = inlined_call_operand.hbm [shape: f32[256,256], index: 0, kind: input, shape index: {}]
  %s1 = inlined_call_operand.hbm [shape: bf16[256,128], index: 1, kind: input, shape index: {}]
  %s2 = inlined_call_operand.vmem [shape: f32[1,128], index: 2, kind: input, shape index: {}]
  %s3 = inlined_call_operand.hbm [shape: bf16[128,128], index: 3, kind: input, shape index: {}]
  %s4 = inlined_call_operand.vmem [shape: f32[1,128], index: 4, kind: input, shape index: {}]
  %s5 = inlined_call_operand.vmem [shape: f32[256,10], index: 5, kind: output, shape index: {}]
  %s6 = sld [smem:[#allocation0]]
  $region42: #{tpu_custom_call.1} parent=0
    _
  %s8 = ssub.s32 1, %s6
  %s9 = scalar_select 0, %s8, %s6
  $region1: #{tpu_custom_call.1} parent=0
    #allocation2 [shape = 'u8[262144]{0}', space=vmem, size = 0x40000, scoped, tag = 'input window, operand 0, single buffered']
    #allocation3 [shape = 's32[1]{0}', space=sflag, size = 0x4, scoped, tag = 'scoped memory for tpu_custom_call.1']
    #allocation4 [shape = 'u8[65536]{0}', space=vmem, size = 0x10000, scoped, tag = 'input window, operand 1, single buffered']
    #allocation5 [shape = 's32[1]{0}', space=sflag, size = 0x4, scoped, tag = 'scoped memory for tpu_custom_call.1']
    #allocation6 [shape = 'u8[32768]{0}', space=vmem, size = 0x8000, scoped, tag = 'input window, operand 3, single buffered']
    %10 = vsyncpa [#allocation3], 0
    %11 = vsyncpa [#allocation5], 0
    // Predicated region
    $region2: #{tpu_custom_call.1} parent=1 // pred_check
      _
    $region3: #{tpu_custom_call.1} parent=1 // pred_check_branch
      %13 = sbr.rel (0) target = $region5
    $region4: #{tpu_custom_call.1} parent=1 // pred_region
      %s15 = ssub.s32 8192, 8192
      %16 = vsyncadd [#allocation3], %s15
      %s17 = sshll.u32 [#allocation2], 4
      %s18 = int_to_ptr.vmem [resolvable:$true] %s17
      %23 = dma.hbm_to_vmem [thread:$0]  %s0, 8192, %s18, [#allocation3], 256, 256, 16
    $region5: #{tpu_custom_call.1} parent=1 // pred_fallthru
      _
    // Predicated region
    $region6: #{tpu_custom_call.1} parent=1 // pred_check
      _
    $region7: #{tpu_custom_call.1} parent=1 // pred_check_branch
      %25 = sbr.rel (0) target = $region9
    $region8: #{tpu_custom_call.1} parent=1 // pred_region
      %s27 = ssub.s32 2048, 2048
      %28 = vsyncadd [#allocation5], %s27
      %s29 = sshll.u32 [#allocation4], 4
      %s30 = int_to_ptr.vmem [resolvable:$true] %s29
      %35 = dma.hbm_to_vmem [thread:$0]  %s1, 2048, %s30, [#allocation5], 64, 64, 4
    $region9: #{tpu_custom_call.1} parent=1 // pred_fallthru
      _
    // Predicated region
    $region10: #{tpu_custom_call.1} parent=1 // pred_check
      _
    $region11: #{tpu_custom_call.1} parent=1 // pred_check_branch
      %37 = sbr.rel (0) target = $region13
    $region12: #{tpu_custom_call.1} parent=1 // pred_region
      _
    $region13: #{tpu_custom_call.1} parent=1 // pred_fallthru
      _
    // Predicated region
    $region14: #{tpu_custom_call.1} parent=1 // pred_check
      _
    $region15: #{tpu_custom_call.1} parent=1 // pred_check_branch
      %39 = sbr.rel (0) target = $region17
    $region16: #{tpu_custom_call.1} parent=1 // pred_region
      %s41 = ssub.s32 1024, 1024
      %42 = vsyncadd [#allocation5], %s41
      %s43 = sshll.u32 [#allocation6], 4
      %s44 = int_to_ptr.vmem [resolvable:$true] %s43
      %49 = dma.hbm_to_vmem [thread:$0]  %s3, 1024, %s44, [#allocation5], 64, 64, 4
    $region17: #{tpu_custom_call.1} parent=1 // pred_fallthru
      _
    // Predicated region
    $region18: #{tpu_custom_call.1} parent=1 // pred_check
      _
    $region19: #{tpu_custom_call.1} parent=1 // pred_check_branch
      %51 = sbr.rel (0) target = $region21
    $region20: #{tpu_custom_call.1} parent=1 // pred_region
      _
    $region21: #{tpu_custom_call.1} parent=1 // pred_fallthru
      _
    // Predicated region
    $region22: #{tpu_custom_call.1} parent=1 // pred_check
      _
    $region23: #{tpu_custom_call.1} parent=1 // pred_check_branch
      %53 = sbr.rel (0) target = $region25
    $region24: #{tpu_custom_call.1} parent=1 // pred_region
      %54 = dma.done [#allocation3], 8192
    $region25: #{tpu_custom_call.1} parent=1 // pred_fallthru
      _
    // Predicated region
    $region26: #{tpu_custom_call.1} parent=1 // pred_check
      _
    $region27: #{tpu_custom_call.1} parent=1 // pred_check_branch
      %56 = sbr.rel (0) target = $region29
    $region28: #{tpu_custom_call.1} parent=1 // pred_region
      %57 = dma.done [#allocation5], 2048
    $region29: #{tpu_custom_call.1} parent=1 // pred_fallthru
      _
    // Predicated region
    $region30: #{tpu_custom_call.1} parent=1 // pred_check
      _
    $region31: #{tpu_custom_call.1} parent=1 // pred_check_branch
      %59 = sbr.rel (0) target = $region33
    $region32: #{tpu_custom_call.1} parent=1 // pred_region
      %60 = dma.done [#allocation5], 1024
    $region33: #{tpu_custom_call.1} parent=1 // pred_fallthru
      _
    %v62 = vld [vmem:[#allocation2] sm:$0xff]
    %v63 = vld [vmem:[#allocation2 + $0x8] sm:$0xff]
    %v64 = vld [vmem:[#allocation2 + $0x10] sm:$0xff]
    %v65 = vld [vmem:[#allocation2 + $0x18] sm:$0xff]
    %v66 = vld [vmem:[#allocation2 + $0x20] sm:$0xff]
    %v67 = vld [vmem:[#allocation2 + $0x28] sm:$0xff]
    %v68 = vld [vmem:[#allocation2 + $0x30] sm:$0xff]
    %v69 = vld [vmem:[#allocation2 + $0x38] sm:$0xff]
    %v70 = vld [vmem:[#allocation2 + $0x40] sm:$0xff]
    %v71 = vld [vmem:[#allocation2 + $0x48] sm:$0xff]
    %v72 = vld [vmem:[#allocation2 + $0x50] sm:$0xff]
    %v73 = vld [vmem:[#allocation2 + $0x58] sm:$0xff]
    %v74 = vld [vmem:[#allocation2 + $0x60] sm:$0xff]
    %v75 = vld [vmem:[#allocation2 + $0x68] sm:$0xff]
    %v76 = vld [vmem:[#allocation2 + $0x70] sm:$0xff]
    %v77 = vld [vmem:[#allocation2 + $0x78] sm:$0xff]
    %v78 = vld [vmem:[#allocation2 + $0x80] sm:$0xff]
    %v79 = vld [vmem:[#allocation2 + $0x88] sm:$0xff]
    %v80 = vld [vmem:[#allocation2 + $0x90] sm:$0xff]
    %v81 = vld [vmem:[#allocation2 + $0x98] sm:$0xff]
    %v82 = vld [vmem:[#allocation2 + $0xa0] sm:$0xff]
    %v83 = vld [vmem:[#allocation2 + $0xa8] sm:$0xff]
    %v84 = vld [vmem:[#allocation2 + $0xb0] sm:$0xff]
    %v85 = vld [vmem:[#allocation2 + $0xb8] sm:$0xff]
    %v86 = vld [vmem:[#allocation2 + $0xc0] sm:$0xff]
    %v87 = vld [vmem:[#allocation2 + $0xc8] sm:$0xff]
    %v88 = vld [vmem:[#allocation2 + $0xd0] sm:$0xff]
    %v89 = vld [vmem:[#allocation2 + $0xd8] sm:$0xff]
    %v90 = vld [vmem:[#allocation2 + $0xe0] sm:$0xff]
    %v91 = vld [vmem:[#allocation2 + $0xe8] sm:$0xff]
    %v92 = vld [vmem:[#allocation2 + $0xf0] sm:$0xff]
    %v93 = vld [vmem:[#allocation2 + $0xf8] sm:$0xff]
    %v94 = vld [vmem:[#allocation2 + $0x100] sm:$0xff]
    %v95 = vld [vmem:[#allocation2 + $0x108] sm:$0xff]
    %v96 = vld [vmem:[#allocation2 + $0x110] sm:$0xff]
    %v97 = vld [vmem:[#allocation2 + $0x118] sm:$0xff]
    %v98 = vld [vmem:[#allocation2 + $0x120] sm:$0xff]
    %v99 = vld [vmem:[#allocation2 + $0x128] sm:$0xff]
    %v100 = vld [vmem:[#allocation2 + $0x130] sm:$0xff]
    %v101 = vld [vmem:[#allocation2 + $0x138] sm:$0xff]
    %v102 = vld [vmem:[#allocation2 + $0x140] sm:$0xff]
    %v103 = vld [vmem:[#allocation2 + $0x148] sm:$0xff]
    %v104 = vld [vmem:[#allocation2 + $0x150] sm:$0xff]
    %v105 = vld [vmem:[#allocation2 + $0x158] sm:$0xff]
    %v106 = vld [vmem:[#allocation2 + $0x160] sm:$0xff]
    %v107 = vld [vmem:[#allocation2 + $0x168] sm:$0xff]
    %v108 = vld [vmem:[#allocation2 + $0x170] sm:$0xff]
    %v109 = vld [vmem:[#allocation2 + $0x178] sm:$0xff]
    %v110 = vld [vmem:[#allocation2 + $0x180] sm:$0xff]
    %v111 = vld [vmem:[#allocation2 + $0x188] sm:$0xff]
    %v112 = vld [vmem:[#allocation2 + $0x190] sm:$0xff]
    %v113 = vld [vmem:[#allocation2 + $0x198] sm:$0xff]
    %v114 = vld [vmem:[#allocation2 + $0x1a0] sm:$0xff]
    %v115 = vld [vmem:[#allocation2 + $0x1a8] sm:$0xff]
    %v116 = vld [vmem:[#allocation2 + $0x1b0] sm:$0xff]
    %v117 = vld [vmem:[#allocation2 + $0x1b8] sm:$0xff]
    %v118 = vld [vmem:[#allocation2 + $0x1c0] sm:$0xff]
    %v119 = vld [vmem:[#allocation2 + $0x1c8] sm:$0xff]
    %v120 = vld [vmem:[#allocation2 + $0x1d0] sm:$0xff]
    %v121 = vld [vmem:[#allocation2 + $0x1d8] sm:$0xff]
    %v122 = vld [vmem:[#allocation2 + $0x1e0] sm:$0xff]
    %v123 = vld [vmem:[#allocation2 + $0x1e8] sm:$0xff]
    %v124 = vld [vmem:[#allocation2 + $0x1f0] sm:$0xff]
    %v125 = vld [vmem:[#allocation2 + $0x1f8] sm:$0xff]
    %v126 = vpack.c.bf16 %v64, %v62
    %v127 = vpack.c.bf16 %v65, %v63
    %v128 = vpack.c.bf16 %v68, %v66
    %v129 = vpack.c.bf16 %v69, %v67
    %v130 = vpack.c.bf16 %v72, %v70
    %v131 = vpack.c.bf16 %v73, %v71
    %v132 = vpack.c.bf16 %v76, %v74
    %v133 = vpack.c.bf16 %v77, %v75
    %v134 = vpack.c.bf16 %v80, %v78
    %v135 = vpack.c.bf16 %v81, %v79
    %v136 = vpack.c.bf16 %v84, %v82
    %v137 = vpack.c.bf16 %v85, %v83
    %v138 = vpack.c.bf16 %v88, %v86
    %v139 = vpack.c.bf16 %v89, %v87
    %v140 = vpack.c.bf16 %v92, %v90
    %v141 = vpack.c.bf16 %v93, %v91
    %v142 = vpack.c.bf16 %v96, %v94
    %v143 = vpack.c.bf16 %v97, %v95
    %v144 = vpack.c.bf16 %v100, %v98
    %v145 = vpack.c.bf16 %v101, %v99
    %v146 = vpack.c.bf16 %v104, %v102
    %v147 = vpack.c.bf16 %v105, %v103
    %v148 = vpack.c.bf16 %v108, %v106
    %v149 = vpack.c.bf16 %v109, %v107
    %v150 = vpack.c.bf16 %v112, %v110
    %v151 = vpack.c.bf16 %v113, %v111
    %v152 = vpack.c.bf16 %v116, %v114
    %v153 = vpack.c.bf16 %v117, %v115
    %v154 = vpack.c.bf16 %v120, %v118
    %v155 = vpack.c.bf16 %v121, %v119
    %v156 = vpack.c.bf16 %v124, %v122
    %v157 = vpack.c.bf16 %v125, %v123
    %v158 = vld [vmem:[#allocation4] sm:$0xf]
    %v159 = vld [vmem:[#allocation4 + $0x4] sm:$0xf]
    %v160 = vld [vmem:[#allocation4 + $0x8] sm:$0xf]
    %v161 = vld [vmem:[#allocation4 + $0xc] sm:$0xf]
    %v162 = vld [vmem:[#allocation4 + $0x10] sm:$0xf]
    %v163 = vld [vmem:[#allocation4 + $0x14] sm:$0xf]
    %v164 = vld [vmem:[#allocation4 + $0x18] sm:$0xf]
    %v165 = vld [vmem:[#allocation4 + $0x1c] sm:$0xf]
    %v166 = vld [vmem:[#allocation4 + $0x20] sm:$0xf]
    %v167 = vld [vmem:[#allocation4 + $0x24] sm:$0xf]
    %v168 = vld [vmem:[#allocation4 + $0x28] sm:$0xf]
    %v169 = vld [vmem:[#allocation4 + $0x2c] sm:$0xf]
    %v170 = vld [vmem:[#allocation4 + $0x30] sm:$0xf]
    %v171 = vld [vmem:[#allocation4 + $0x34] sm:$0xf]
    %v172 = vld [vmem:[#allocation4 + $0x38] sm:$0xf]
    %v173 = vld [vmem:[#allocation4 + $0x3c] sm:$0xf]
    %v174 = vld [vmem:[#allocation4 + $0x40] sm:$0xf]
    %v175 = vld [vmem:[#allocation4 + $0x44] sm:$0xf]
    %v176 = vld [vmem:[#allocation4 + $0x48] sm:$0xf]
    %v177 = vld [vmem:[#allocation4 + $0x4c] sm:$0xf]
    %v178 = vld [vmem:[#allocation4 + $0x50] sm:$0xf]
    %v179 = vld [vmem:[#allocation4 + $0x54] sm:$0xf]
    %v180 = vld [vmem:[#allocation4 + $0x58] sm:$0xf]
    %v181 = vld [vmem:[#allocation4 + $0x5c] sm:$0xf]
    %v182 = vld [vmem:[#allocation4 + $0x60] sm:$0xf]
    %v183 = vld [vmem:[#allocation4 + $0x64] sm:$0xf]
    %v184 = vld [vmem:[#allocation4 + $0x68] sm:$0xf]
    %v185 = vld [vmem:[#allocation4 + $0x6c] sm:$0xf]
    %v186 = vld [vmem:[#allocation4 + $0x70] sm:$0xf]
    %v187 = vld [vmem:[#allocation4 + $0x74] sm:$0xf]
    %v188 = vld [vmem:[#allocation4 + $0x78] sm:$0xf]
    %v189 = vld [vmem:[#allocation4 + $0x7c] sm:$0xf]
    %v190 = vld [vmem:[%s2] sm:$0x1]
    %v192 = vlaneseq
    %v193 = vshrl.u32 %v192, 7
    %v194 = vsub.s32 0, %v193
    %v195 = vrot.slane %v190, %v194
    %v229 = vunpack.c.l.b16 %v158
    %v230 = vunpack.c.l.b16 %v159
    %v231 = vunpack.c.l.b16 %v160
    %v232 = vunpack.c.l.b16 %v161
    %v233 = vunpack.c.l.b16 %v162
    %v234 = vunpack.c.l.b16 %v163
    %v235 = vunpack.c.l.b16 %v164
    %v236 = vunpack.c.l.b16 %v165
    %v237 = vunpack.c.l.b16 %v166
    %v238 = vunpack.c.l.b16 %v167
    %v239 = vunpack.c.l.b16 %v168
    %v240 = vunpack.c.l.b16 %v169
    %v241 = vunpack.c.l.b16 %v170
    %v242 = vunpack.c.l.b16 %v171
    %v243 = vunpack.c.l.b16 %v172
    %v244 = vunpack.c.l.b16 %v173
    %v245 = vunpack.c.l.b16 %v174
    %v246 = vunpack.c.l.b16 %v175
    %v247 = vunpack.c.l.b16 %v176
    %v248 = vunpack.c.l.b16 %v177
    %v249 = vunpack.c.l.b16 %v178
    %v250 = vunpack.c.l.b16 %v179
    %v251 = vunpack.c.l.b16 %v180
    %v252 = vunpack.c.l.b16 %v181
    %v253 = vunpack.c.l.b16 %v182
    %v254 = vunpack.c.l.b16 %v183
    %v255 = vunpack.c.l.b16 %v184
    %v256 = vunpack.c.l.b16 %v185
    %v257 = vunpack.c.l.b16 %v186
    %v258 = vunpack.c.l.b16 %v187
    %v259 = vunpack.c.l.b16 %v188
    %v260 = vunpack.c.l.b16 %v189
    %v261 = vpack.c.b16 %v230, %v229
    %v262 = vpack.c.b16 %v232, %v231
    %v263 = vpack.c.b16 %v234, %v233
    %v264 = vpack.c.b16 %v236, %v235
    %v265 = vpack.c.b16 %v238, %v237
    %v266 = vpack.c.b16 %v240, %v239
    %v267 = vpack.c.b16 %v242, %v241
    %v268 = vpack.c.b16 %v244, %v243
    %v269 = vpack.c.b16 %v246, %v245
    %v270 = vpack.c.b16 %v248, %v247
    %v271 = vpack.c.b16 %v250, %v249
    %v272 = vpack.c.b16 %v252, %v251
    %v273 = vpack.c.b16 %v254, %v253
    %v274 = vpack.c.b16 %v256, %v255
    %v275 = vpack.c.b16 %v258, %v257
    %v276 = vpack.c.b16 %v260, %v259
    %293 = vmatprep.subr.bf16.mxu0 0
    %294 = vmatpush1.bf16.msra.mxu0 %v261
    %295 = vmatprep.subr.bf16.mxu0 0
    %296 = vmatpush1.bf16.msra.mxu0 %v262
    %297 = vmatprep.subr.bf16.mxu0 0
    %298 = vmatpush1.bf16.msra.mxu0 %v263
    %299 = vmatprep.subr.bf16.mxu0 0
    %300 = vmatpush1.bf16.msra.mxu0 %v264
    %301 = vmatprep.subr.bf16.mxu0 0
    %302 = vmatpush1.bf16.msra.mxu0 %v265
    %303 = vmatprep.subr.bf16.mxu0 0
    %304 = vmatpush1.bf16.msra.mxu0 %v266
    %305 = vmatprep.subr.bf16.mxu0 0
    %306 = vmatpush1.bf16.msra.mxu0 %v267
    %307 = vmatprep.subr.bf16.mxu0 0
    %308 = vmatpush1.bf16.msra.mxu0 %v268
    %309 = vmatprep.subr.bf16.mxu0 0
    %310 = vmatpush1.bf16.msra.mxu0 %v269
    %311 = vmatprep.subr.bf16.mxu0 0
    %312 = vmatpush1.bf16.msra.mxu0 %v270
    %313 = vmatprep.subr.bf16.mxu0 0
    %314 = vmatpush1.bf16.msra.mxu0 %v271
    %315 = vmatprep.subr.bf16.mxu0 0
    %316 = vmatpush1.bf16.msra.mxu0 %v272
    %317 = vmatprep.subr.bf16.mxu0 0
    %318 = vmatpush1.bf16.msra.mxu0 %v273
    %319 = vmatprep.subr.bf16.mxu0 0
    %320 = vmatpush1.bf16.msra.mxu0 %v274
    %321 = vmatprep.subr.bf16.mxu0 0
    %322 = vmatpush1.bf16.msra.mxu0 %v275
    %323 = vmatprep.subr.bf16.mxu0 0
    %324 = vmatpush1.bf16.msra.mxu0 %v276
    %325 = vmatprep.mubr.bf16.mxu0 %v127
    %326 = vmatmul.mubr.bf16.gmra.mrb[0].mxu0 %v126
    %v327 = vpop.f32.mrb[0].mxu0
    %v328 = vadd.f32 %v195, %v327
    %v329 = vpop.f32.mrb[0].mxu0
    %v330 = vpop.f32.mrb[0].mxu0
    %v331 = vadd.f32 %v195, %v330
    %v332 = vpop.f32.mrb[0].mxu0
    %333 = vmatprep.mubr.bf16.mxu0 %v129
    %334 = vmatmul.mubr.bf16.gmra.mrb[0].mxu0 %v128
    %v335 = vpop.f32.mrb[0].mxu0
    %v336 = vadd.f32 %v195, %v335
    %v337 = vpop.f32.mrb[0].mxu0
    %v338 = vpop.f32.mrb[0].mxu0
    %v339 = vadd.f32 %v195, %v338
    %v340 = vpop.f32.mrb[0].mxu0
    %341 = vmatprep.mubr.bf16.mxu0 %v131
    %342 = vmatmul.mubr.bf16.gmra.mrb[0].mxu0 %v130
    %v343 = vpop.f32.mrb[0].mxu0
    %v344 = vadd.f32 %v195, %v343
    %v345 = vpop.f32.mrb[0].mxu0
    %v346 = vpop.f32.mrb[0].mxu0
    %v347 = vadd.f32 %v195, %v346
    %v348 = vpop.f32.mrb[0].mxu0
    %349 = vmatprep.mubr.bf16.mxu0 %v133
    %350 = vmatmul.mubr.bf16.gmra.mrb[0].mxu0 %v132
    %v351 = vpop.f32.mrb[0].mxu0
    %v352 = vadd.f32 %v195, %v351
    %v353 = vpop.f32.mrb[0].mxu0
    %v354 = vpop.f32.mrb[0].mxu0
    %v355 = vadd.f32 %v195, %v354
    %v356 = vpop.f32.mrb[0].mxu0
    %357 = vmatprep.mubr.bf16.mxu0 %v135
    %358 = vmatmul.mubr.bf16.gmra.mrb[0].mxu0 %v134
    %v359 = vpop.f32.mrb[0].mxu0
    %v360 = vadd.f32 %v195, %v359
    %v361 = vpop.f32.mrb[0].mxu0
    %v362 = vpop.f32.mrb[0].mxu0
    %v363 = vadd.f32 %v195, %v362
    %v364 = vpop.f32.mrb[0].mxu0
    %365 = vmatprep.mubr.bf16.mxu0 %v137
    %366 = vmatmul.mubr.bf16.gmra.mrb[0].mxu0 %v136
    %v367 = vpop.f32.mrb[0].mxu0
    %v368 = vadd.f32 %v195, %v367
    %v369 = vpop.f32.mrb[0].mxu0
    %v370 = vpop.f32.mrb[0].mxu0
    %v371 = vadd.f32 %v195, %v370
    %v372 = vpop.f32.mrb[0].mxu0
    %373 = vmatprep.mubr.bf16.mxu0 %v139
    %374 = vmatmul.mubr.bf16.gmra.mrb[0].mxu0 %v138
    %v375 = vpop.f32.mrb[0].mxu0
    %v376 = vadd.f32 %v195, %v375
    %v377 = vpop.f32.mrb[0].mxu0
    %v378 = vpop.f32.mrb[0].mxu0
    %v379 = vadd.f32 %v195, %v378
    %v380 = vpop.f32.mrb[0].mxu0
    %381 = vmatprep.mubr.bf16.mxu0 %v141
    %382 = vmatmul.mubr.bf16.gmra.mrb[0].mxu0 %v140
    %v383 = vpop.f32.mrb[0].mxu0
    %v384 = vadd.f32 %v195, %v383
    %v385 = vpop.f32.mrb[0].mxu0
    %v386 = vpop.f32.mrb[0].mxu0
    %v387 = vadd.f32 %v195, %v386
    %v388 = vpop.f32.mrb[0].mxu0
    %389 = vmatprep.mubr.bf16.mxu0 %v143
    %390 = vmatmul.mubr.bf16.gmra.mrb[0].mxu0 %v142
    %v391 = vpop.f32.mrb[0].mxu0
    %v392 = vadd.f32 %v195, %v391
    %v393 = vpop.f32.mrb[0].mxu0
    %v394 = vpop.f32.mrb[0].mxu0
    %v395 = vadd.f32 %v195, %v394
    %v396 = vpop.f32.mrb[0].mxu0
    %397 = vmatprep.mubr.bf16.mxu0 %v145
    %398 = vmatmul.mubr.bf16.gmra.mrb[0].mxu0 %v144
    %v399 = vpop.f32.mrb[0].mxu0
    %v400 = vadd.f32 %v195, %v399
    %v401 = vpop.f32.mrb[0].mxu0
    %v402 = vpop.f32.mrb[0].mxu0
    %v403 = vadd.f32 %v195, %v402
    %v404 = vpop.f32.mrb[0].mxu0
    %405 = vmatprep.mubr.bf16.mxu0 %v147
    %406 = vmatmul.mubr.bf16.gmra.mrb[0].mxu0 %v146
    %v407 = vpop.f32.mrb[0].mxu0
    %v408 = vadd.f32 %v195, %v407
    %v409 = vpop.f32.mrb[0].mxu0
    %v410 = vpop.f32.mrb[0].mxu0
    %v411 = vadd.f32 %v195, %v410
    %v412 = vpop.f32.mrb[0].mxu0
    %413 = vmatprep.mubr.bf16.mxu0 %v149
    %414 = vmatmul.mubr.bf16.gmra.mrb[0].mxu0 %v148
    %v415 = vpop.f32.mrb[0].mxu0
    %v416 = vadd.f32 %v195, %v415
    %v417 = vpop.f32.mrb[0].mxu0
    %v418 = vpop.f32.mrb[0].mxu0
    %v419 = vadd.f32 %v195, %v418
    %v420 = vpop.f32.mrb[0].mxu0
    %421 = vmatprep.mubr.bf16.mxu0 %v151
    %422 = vmatmul.mubr.bf16.gmra.mrb[0].mxu0 %v150
    %v423 = vpop.f32.mrb[0].mxu0
    %v424 = vadd.f32 %v195, %v423
    %v425 = vpop.f32.mrb[0].mxu0
    %v426 = vpop.f32.mrb[0].mxu0
    %v427 = vadd.f32 %v195, %v426
    %v428 = vpop.f32.mrb[0].mxu0
    %429 = vmatprep.mubr.bf16.mxu0 %v153
    %430 = vmatmul.mubr.bf16.gmra.mrb[0].mxu0 %v152
    %v431 = vpop.f32.mrb[0].mxu0
    %v432 = vadd.f32 %v195, %v431
    %v433 = vpop.f32.mrb[0].mxu0
    %v434 = vpop.f32.mrb[0].mxu0
    %v435 = vadd.f32 %v195, %v434
    %v436 = vpop.f32.mrb[0].mxu0
    %437 = vmatprep.mubr.bf16.mxu0 %v155
    %438 = vmatmul.mubr.bf16.gmra.mrb[0].mxu0 %v154
    %v439 = vpop.f32.mrb[0].mxu0
    %v440 = vadd.f32 %v195, %v439
    %v441 = vpop.f32.mrb[0].mxu0
    %v442 = vpop.f32.mrb[0].mxu0
    %v443 = vadd.f32 %v195, %v442
    %v444 = vpop.f32.mrb[0].mxu0
    %445 = vmatprep.mubr.bf16.mxu0 %v157
    %446 = vmatmul.mubr.bf16.gmra.mrb[0].mxu0 %v156
    %v447 = vpop.f32.mrb[0].mxu0
    %v448 = vadd.f32 %v195, %v447
    %v449 = vpop.f32.mrb[0].mxu0
    %v450 = vpop.f32.mrb[0].mxu0
    %v451 = vadd.f32 %v195, %v450
    %v452 = vpop.f32.mrb[0].mxu0
    %453 = vdwg.mxu0
    %v454 = vmul.f32 %v328, 0.5
    %v455 = vmul.f32 %v331, 0.5
    %v456 = vmul.f32 %v336, 0.5
    %v457 = vmul.f32 %v339, 0.5
    %v458 = vmul.f32 %v344, 0.5
    %v459 = vmul.f32 %v347, 0.5
    %v460 = vmul.f32 %v352, 0.5
    %v461 = vmul.f32 %v355, 0.5
    %v462 = vmul.f32 %v360, 0.5
    %v463 = vmul.f32 %v363, 0.5
    %v464 = vmul.f32 %v368, 0.5
    %v465 = vmul.f32 %v371, 0.5
    %v466 = vmul.f32 %v376, 0.5
    %v467 = vmul.f32 %v379, 0.5
    %v468 = vmul.f32 %v384, 0.5
    %v469 = vmul.f32 %v387, 0.5
    %v470 = vmul.f32 %v392, 0.5
    %v471 = vmul.f32 %v395, 0.5
    %v472 = vmul.f32 %v400, 0.5
    %v473 = vmul.f32 %v403, 0.5
    %v474 = vmul.f32 %v408, 0.5
    %v475 = vmul.f32 %v411, 0.5
    %v476 = vmul.f32 %v416, 0.5
    %v477 = vmul.f32 %v419, 0.5
    %v478 = vmul.f32 %v424, 0.5
    %v479 = vmul.f32 %v427, 0.5
    %v480 = vmul.f32 %v432, 0.5
    %v481 = vmul.f32 %v435, 0.5
    %v482 = vmul.f32 %v440, 0.5
    %v483 = vmul.f32 %v443, 0.5
    %v484 = vmul.f32 %v448, 0.5
    %v485 = vmul.f32 %v451, 0.5
    %v486 = vtanh.pop %v454
    %v487 = vtanh.pop %v455
    %v488 = vtanh.pop %v456
    %v489 = vtanh.pop %v457
    %v490 = vtanh.pop %v458
    %v491 = vtanh.pop %v459
    %v492 = vtanh.pop %v460
    %v493 = vtanh.pop %v461
    %v494 = vtanh.pop %v462
    %v495 = vtanh.pop %v463
    %v496 = vtanh.pop %v464
    %v497 = vtanh.pop %v465
    %v498 = vtanh.pop %v466
    %v499 = vtanh.pop %v467
    %v500 = vtanh.pop %v468
    %v501 = vtanh.pop %v469
    %v502 = vtanh.pop %v470
    %v503 = vtanh.pop %v471
    %v504 = vtanh.pop %v472
    %v505 = vtanh.pop %v473
    %v506 = vtanh.pop %v474
    %v507 = vtanh.pop %v475
    %v508 = vtanh.pop %v476
    %v509 = vtanh.pop %v477
    %v510 = vtanh.pop %v478
    %v511 = vtanh.pop %v479
    %v512 = vtanh.pop %v480
    %v513 = vtanh.pop %v481
    %v514 = vtanh.pop %v482
    %v515 = vtanh.pop %v483
    %v516 = vtanh.pop %v484
    %v517 = vtanh.pop %v485
    %v518 = vmul.f32 %v486, 0.5
    %v519 = vmul.f32 %v487, 0.5
    %v520 = vmul.f32 %v488, 0.5
    %v521 = vmul.f32 %v489, 0.5
    %v522 = vmul.f32 %v490, 0.5
    %v523 = vmul.f32 %v491, 0.5
    %v524 = vmul.f32 %v492, 0.5
    %v525 = vmul.f32 %v493, 0.5
    %v526 = vmul.f32 %v494, 0.5
    %v527 = vmul.f32 %v495, 0.5
    %v528 = vmul.f32 %v496, 0.5
    %v529 = vmul.f32 %v497, 0.5
    %v530 = vmul.f32 %v498, 0.5
    %v531 = vmul.f32 %v499, 0.5
    %v532 = vmul.f32 %v500, 0.5
    %v533 = vmul.f32 %v501, 0.5
    %v534 = vmul.f32 %v502, 0.5
    %v535 = vmul.f32 %v503, 0.5
    %v536 = vmul.f32 %v504, 0.5
    %v537 = vmul.f32 %v505, 0.5
    %v538 = vmul.f32 %v506, 0.5
    %v539 = vmul.f32 %v507, 0.5
    %v540 = vmul.f32 %v508, 0.5
    %v541 = vmul.f32 %v509, 0.5
    %v542 = vmul.f32 %v510, 0.5
    %v543 = vmul.f32 %v511, 0.5
    %v544 = vmul.f32 %v512, 0.5
    %v545 = vmul.f32 %v513, 0.5
    %v546 = vmul.f32 %v514, 0.5
    %v547 = vmul.f32 %v515, 0.5
    %v548 = vmul.f32 %v516, 0.5
    %v549 = vmul.f32 %v517, 0.5
    %v550 = vadd.f32 %v518, 0.5
    %v551 = vadd.f32 %v519, 0.5
    %v552 = vadd.f32 %v520, 0.5
    %v553 = vadd.f32 %v521, 0.5
    %v554 = vadd.f32 %v522, 0.5
    %v555 = vadd.f32 %v523, 0.5
    %v556 = vadd.f32 %v524, 0.5
    %v557 = vadd.f32 %v525, 0.5
    %v558 = vadd.f32 %v526, 0.5
    %v559 = vadd.f32 %v527, 0.5
    %v560 = vadd.f32 %v528, 0.5
    %v561 = vadd.f32 %v529, 0.5
    %v562 = vadd.f32 %v530, 0.5
    %v563 = vadd.f32 %v531, 0.5
    %v564 = vadd.f32 %v532, 0.5
    %v565 = vadd.f32 %v533, 0.5
    %v566 = vadd.f32 %v534, 0.5
    %v567 = vadd.f32 %v535, 0.5
    %v568 = vadd.f32 %v536, 0.5
    %v569 = vadd.f32 %v537, 0.5
    %v570 = vadd.f32 %v538, 0.5
    %v571 = vadd.f32 %v539, 0.5
    %v572 = vadd.f32 %v540, 0.5
    %v573 = vadd.f32 %v541, 0.5
    %v574 = vadd.f32 %v542, 0.5
    %v575 = vadd.f32 %v543, 0.5
    %v576 = vadd.f32 %v544, 0.5
    %v577 = vadd.f32 %v545, 0.5
    %v578 = vadd.f32 %v546, 0.5
    %v579 = vadd.f32 %v547, 0.5
    %v580 = vadd.f32 %v548, 0.5
    %v581 = vadd.f32 %v549, 0.5
    %v582 = vpack.c.bf16 %v551, %v550
    %v583 = vpack.c.bf16 %v553, %v552
    %v584 = vpack.c.bf16 %v555, %v554
    %v585 = vpack.c.bf16 %v557, %v556
    %v586 = vpack.c.bf16 %v559, %v558
    %v587 = vpack.c.bf16 %v561, %v560
    %v588 = vpack.c.bf16 %v563, %v562
    %v589 = vpack.c.bf16 %v565, %v564
    %v590 = vpack.c.bf16 %v567, %v566
    %v591 = vpack.c.bf16 %v569, %v568
    %v592 = vpack.c.bf16 %v571, %v570
    %v593 = vpack.c.bf16 %v573, %v572
    %v594 = vpack.c.bf16 %v575, %v574
    %v595 = vpack.c.bf16 %v577, %v576
    %v596 = vpack.c.bf16 %v579, %v578
    %v597 = vpack.c.bf16 %v581, %v580
    %v598 = vld [vmem:[#allocation6] sm:$0xf]
    %v599 = vld [vmem:[#allocation6 + $0x4] sm:$0xf]
    %v600 = vld [vmem:[#allocation6 + $0x8] sm:$0xf]
    %v601 = vld [vmem:[#allocation6 + $0xc] sm:$0xf]
    %v602 = vld [vmem:[#allocation6 + $0x10] sm:$0xf]
    %v603 = vld [vmem:[#allocation6 + $0x14] sm:$0xf]
    %v604 = vld [vmem:[#allocation6 + $0x18] sm:$0xf]
    %v605 = vld [vmem:[#allocation6 + $0x1c] sm:$0xf]
    %v606 = vld [vmem:[#allocation6 + $0x20] sm:$0xf]
    %v607 = vld [vmem:[#allocation6 + $0x24] sm:$0xf]
    %v608 = vld [vmem:[#allocation6 + $0x28] sm:$0xf]
    %v609 = vld [vmem:[#allocation6 + $0x2c] sm:$0xf]
    %v610 = vld [vmem:[#allocation6 + $0x30] sm:$0xf]
    %v611 = vld [vmem:[#allocation6 + $0x34] sm:$0xf]
    %v612 = vld [vmem:[#allocation6 + $0x38] sm:$0xf]
    %v613 = vld [vmem:[#allocation6 + $0x3c] sm:$0xf]
    %v614 = vld [vmem:[%s4] sm:$0x1]
    %v616 = vlaneseq
    %v617 = vshrl.u32 %v616, 7
    %v618 = vsub.s32 0, %v617
    %v619 = vrot.slane %v614, %v618
    %v637 = vunpack.c.l.b16 %v598
    %v638 = vunpack.c.l.b16 %v599
    %v639 = vunpack.c.l.b16 %v600
    %v640 = vunpack.c.l.b16 %v601
    %v641 = vunpack.c.l.b16 %v602
    %v642 = vunpack.c.l.b16 %v603
    %v643 = vunpack.c.l.b16 %v604
    %v644 = vunpack.c.l.b16 %v605
    %v645 = vunpack.c.l.b16 %v606
    %v646 = vunpack.c.l.b16 %v607
    %v647 = vunpack.c.l.b16 %v608
    %v648 = vunpack.c.l.b16 %v609
    %v649 = vunpack.c.l.b16 %v610
    %v650 = vunpack.c.l.b16 %v611
    %v651 = vunpack.c.l.b16 %v612
    %v652 = vunpack.c.l.b16 %v613
    %v653 = vpack.c.b16 %v638, %v637
    %v654 = vpack.c.b16 %v640, %v639
    %v655 = vpack.c.b16 %v642, %v641
    %v656 = vpack.c.b16 %v644, %v643
    %v657 = vpack.c.b16 %v646, %v645
    %v658 = vpack.c.b16 %v648, %v647
    %v659 = vpack.c.b16 %v650, %v649
    %v660 = vpack.c.b16 %v652, %v651
    %669 = vmatprep.subr.bf16.mxu0 0
    %670 = vmatpush1.bf16.msra.mxu0 %v653
    %671 = vmatprep.subr.bf16.mxu0 0
    %672 = vmatpush1.bf16.msra.mxu0 %v654
    %673 = vmatprep.subr.bf16.mxu0 0
    %674 = vmatpush1.bf16.msra.mxu0 %v655
    %675 = vmatprep.subr.bf16.mxu0 0
    %676 = vmatpush1.bf16.msra.mxu0 %v656
    %677 = vmatprep.subr.bf16.mxu0 0
    %678 = vmatpush1.bf16.msra.mxu0 %v657
    %679 = vmatprep.subr.bf16.mxu0 0
    %680 = vmatpush1.bf16.msra.mxu0 %v658
    %681 = vmatprep.subr.bf16.mxu0 0
    %682 = vmatpush1.bf16.msra.mxu0 %v659
    %683 = vmatprep.subr.bf16.mxu0 0
    %684 = vmatpush1.bf16.msra.mxu0 %v660
    %685 = vmatprep.subr.bf16.mxu0 0
    %686 = vmatpush1.bf16.msra.mxu0 0
    %687 = vmatprep.subr.bf16.mxu0 0
    %688 = vmatpush1.bf16.msra.mxu0 0
    %689 = vmatprep.subr.bf16.mxu0 0
    %690 = vmatpush1.bf16.msra.mxu0 0
    %691 = vmatprep.subr.bf16.mxu0 0
    %692 = vmatpush1.bf16.msra.mxu0 0
    %693 = vmatprep.subr.bf16.mxu0 0
    %694 = vmatpush1.bf16.msra.mxu0 0
    %695 = vmatprep.subr.bf16.mxu0 0
    %696 = vmatpush1.bf16.msra.mxu0 0
    %697 = vmatprep.subr.bf16.mxu0 0
    %698 = vmatpush1.bf16.msra.mxu0 0
    %699 = vmatprep.subr.bf16.mxu0 0
    %700 = vmatpush1.bf16.msra.mxu0 0
    %701 = vmatprep.mubr.bf16.mxu0 0
    %702 = vmatmul.mubr.bf16.gmra.mrb[0].mxu0 %v582
    %v703 = vpop.f32.mrb[0].mxu0
    %v704 = vadd.f32 %v619, %v703
    %v705 = vpop.f32.mrb[0].mxu0
    %v706 = vpop.f32.mrb[0].mxu0
    %v707 = vadd.f32 %v619, %v706
    %v708 = vpop.f32.mrb[0].mxu0
    %709 = vmatprep.mubr.bf16.mxu0 0
    %710 = vmatmul.mubr.bf16.gmra.mrb[0].mxu0 %v583
    %v711 = vpop.f32.mrb[0].mxu0
    %v712 = vadd.f32 %v619, %v711
    %v713 = vpop.f32.mrb[0].mxu0
    %v714 = vpop.f32.mrb[0].mxu0
    %v715 = vadd.f32 %v619, %v714
    %v716 = vpop.f32.mrb[0].mxu0
    %717 = vmatprep.mubr.bf16.mxu0 0
    %718 = vmatmul.mubr.bf16.gmra.mrb[0].mxu0 %v584
    %v719 = vpop.f32.mrb[0].mxu0
    %v720 = vadd.f32 %v619, %v719
    %v721 = vpop.f32.mrb[0].mxu0
    %v722 = vpop.f32.mrb[0].mxu0
    %v723 = vadd.f32 %v619, %v722
    %v724 = vpop.f32.mrb[0].mxu0
    %725 = vmatprep.mubr.bf16.mxu0 0
    %726 = vmatmul.mubr.bf16.gmra.mrb[0].mxu0 %v585
    %v727 = vpop.f32.mrb[0].mxu0
    %v728 = vadd.f32 %v619, %v727
    %v729 = vpop.f32.mrb[0].mxu0
    %v730 = vpop.f32.mrb[0].mxu0
    %v731 = vadd.f32 %v619, %v730
    %v732 = vpop.f32.mrb[0].mxu0
    %733 = vmatprep.mubr.bf16.mxu0 0
    %734 = vmatmul.mubr.bf16.gmra.mrb[0].mxu0 %v586
    %v735 = vpop.f32.mrb[0].mxu0
    %v736 = vadd.f32 %v619, %v735
    %v737 = vpop.f32.mrb[0].mxu0
    %v738 = vpop.f32.mrb[0].mxu0
    %v739 = vadd.f32 %v619, %v738
    %v740 = vpop.f32.mrb[0].mxu0
    %741 = vmatprep.mubr.bf16.mxu0 0
    %742 = vmatmul.mubr.bf16.gmra.mrb[0].mxu0 %v587
    %v743 = vpop.f32.mrb[0].mxu0
    %v744 = vadd.f32 %v619, %v743
    %v745 = vpop.f32.mrb[0].mxu0
    %v746 = vpop.f32.mrb[0].mxu0
    %v747 = vadd.f32 %v619, %v746
    %v748 = vpop.f32.mrb[0].mxu0
    %749 = vmatprep.mubr.bf16.mxu0 0
    %750 = vmatmul.mubr.bf16.gmra.mrb[0].mxu0 %v588
    %v751 = vpop.f32.mrb[0].mxu0
    %v752 = vadd.f32 %v619, %v751
    %v753 = vpop.f32.mrb[0].mxu0
    %v754 = vpop.f32.mrb[0].mxu0
    %v755 = vadd.f32 %v619, %v754
    %v756 = vpop.f32.mrb[0].mxu0
    %757 = vmatprep.mubr.bf16.mxu0 0
    %758 = vmatmul.mubr.bf16.gmra.mrb[0].mxu0 %v589
    %v759 = vpop.f32.mrb[0].mxu0
    %v760 = vadd.f32 %v619, %v759
    %v761 = vpop.f32.mrb[0].mxu0
    %v762 = vpop.f32.mrb[0].mxu0
    %v763 = vadd.f32 %v619, %v762
    %v764 = vpop.f32.mrb[0].mxu0
    %765 = vmatprep.mubr.bf16.mxu0 0
    %766 = vmatmul.mubr.bf16.gmra.mrb[0].mxu0 %v590
    %v767 = vpop.f32.mrb[0].mxu0
    %v768 = vadd.f32 %v619, %v767
    %v769 = vpop.f32.mrb[0].mxu0
    %v770 = vpop.f32.mrb[0].mxu0
    %v771 = vadd.f32 %v619, %v770
    %v772 = vpop.f32.mrb[0].mxu0
    %773 = vmatprep.mubr.bf16.mxu0 0
    %774 = vmatmul.mubr.bf16.gmra.mrb[0].mxu0 %v591
    %v775 = vpop.f32.mrb[0].mxu0
    %v776 = vadd.f32 %v619, %v775
    %v777 = vpop.f32.mrb[0].mxu0
    %v778 = vpop.f32.mrb[0].mxu0
    %v779 = vadd.f32 %v619, %v778
    %v780 = vpop.f32.mrb[0].mxu0
    %781 = vmatprep.mubr.bf16.mxu0 0
    %782 = vmatmul.mubr.bf16.gmra.mrb[0].mxu0 %v592
    %v783 = vpop.f32.mrb[0].mxu0
    %v784 = vadd.f32 %v619, %v783
    %v785 = vpop.f32.mrb[0].mxu0
    %v786 = vpop.f32.mrb[0].mxu0
    %v787 = vadd.f32 %v619, %v786
    %v788 = vpop.f32.mrb[0].mxu0
    %789 = vmatprep.mubr.bf16.mxu0 0
    %790 = vmatmul.mubr.bf16.gmra.mrb[0].mxu0 %v593
    %v791 = vpop.f32.mrb[0].mxu0
    %v792 = vadd.f32 %v619, %v791
    %v793 = vpop.f32.mrb[0].mxu0
    %v794 = vpop.f32.mrb[0].mxu0
    %v795 = vadd.f32 %v619, %v794
    %v796 = vpop.f32.mrb[0].mxu0
    %797 = vmatprep.mubr.bf16.mxu0 0
    %798 = vmatmul.mubr.bf16.gmra.mrb[0].mxu0 %v594
    %v799 = vpop.f32.mrb[0].mxu0
    %v800 = vadd.f32 %v619, %v799
    %v801 = vpop.f32.mrb[0].mxu0
    %v802 = vpop.f32.mrb[0].mxu0
    %v803 = vadd.f32 %v619, %v802
    %v804 = vpop.f32.mrb[0].mxu0
    %805 = vmatprep.mubr.bf16.mxu0 0
    %806 = vmatmul.mubr.bf16.gmra.mrb[0].mxu0 %v595
    %v807 = vpop.f32.mrb[0].mxu0
    %v808 = vadd.f32 %v619, %v807
    %v809 = vpop.f32.mrb[0].mxu0
    %v810 = vpop.f32.mrb[0].mxu0
    %v811 = vadd.f32 %v619, %v810
    %v812 = vpop.f32.mrb[0].mxu0
    %813 = vmatprep.mubr.bf16.mxu0 0
    %814 = vmatmul.mubr.bf16.gmra.mrb[0].mxu0 %v596
    %v815 = vpop.f32.mrb[0].mxu0
    %v816 = vadd.f32 %v619, %v815
    %v817 = vpop.f32.mrb[0].mxu0
    %v818 = vpop.f32.mrb[0].mxu0
    %v819 = vadd.f32 %v619, %v818
    %v820 = vpop.f32.mrb[0].mxu0
    %821 = vmatprep.mubr.bf16.mxu0 0
    %822 = vmatmul.mubr.bf16.gmra.mrb[0].mxu0 %v597
    %v823 = vpop.f32.mrb[0].mxu0
    %v824 = vadd.f32 %v619, %v823
    %v825 = vpop.f32.mrb[0].mxu0
    %v826 = vpop.f32.mrb[0].mxu0
    %v827 = vadd.f32 %v619, %v826
    %v828 = vpop.f32.mrb[0].mxu0
    %829 = vdwg.mxu0
    %830 = vmax.xlane.f32.xlu0 %v704
    %v831 = vpop.xlane.xlu0 %830
    %832 = vmax.xlane.f32.xlu0 %v707
    %v833 = vpop.xlane.xlu0 %832
    %834 = vmax.xlane.f32.xlu0 %v712
    %v835 = vpop.xlane.xlu0 %834
    %836 = vmax.xlane.f32.xlu0 %v715
    %v837 = vpop.xlane.xlu0 %836
    %838 = vmax.xlane.f32.xlu0 %v720
    %v839 = vpop.xlane.xlu0 %838
    %840 = vmax.xlane.f32.xlu0 %v723
    %v841 = vpop.xlane.xlu0 %840
    %842 = vmax.xlane.f32.xlu0 %v728
    %v843 = vpop.xlane.xlu0 %842
    %844 = vmax.xlane.f32.xlu0 %v731
    %v845 = vpop.xlane.xlu0 %844
    %846 = vmax.xlane.f32.xlu0 %v736
    %v847 = vpop.xlane.xlu0 %846
    %848 = vmax.xlane.f32.xlu0 %v739
    %v849 = vpop.xlane.xlu0 %848
    %850 = vmax.xlane.f32.xlu0 %v744
    %v851 = vpop.xlane.xlu0 %850
    %852 = vmax.xlane.f32.xlu0 %v747
    %v853 = vpop.xlane.xlu0 %852
    %854 = vmax.xlane.f32.xlu0 %v752
    %v855 = vpop.xlane.xlu0 %854
    %856 = vmax.xlane.f32.xlu0 %v755
    %v857 = vpop.xlane.xlu0 %856
    %858 = vmax.xlane.f32.xlu0 %v760
    %v859 = vpop.xlane.xlu0 %858
    %860 = vmax.xlane.f32.xlu0 %v763
    %v861 = vpop.xlane.xlu0 %860
    %862 = vmax.xlane.f32.xlu0 %v768
    %v863 = vpop.xlane.xlu0 %862
    %864 = vmax.xlane.f32.xlu0 %v771
    %v865 = vpop.xlane.xlu0 %864
    %866 = vmax.xlane.f32.xlu0 %v776
    %v867 = vpop.xlane.xlu0 %866
    %868 = vmax.xlane.f32.xlu0 %v779
    %v869 = vpop.xlane.xlu0 %868
    %870 = vmax.xlane.f32.xlu0 %v784
    %v871 = vpop.xlane.xlu0 %870
    %872 = vmax.xlane.f32.xlu0 %v787
    %v873 = vpop.xlane.xlu0 %872
    %874 = vmax.xlane.f32.xlu0 %v792
    %v875 = vpop.xlane.xlu0 %874
    %876 = vmax.xlane.f32.xlu0 %v795
    %v877 = vpop.xlane.xlu0 %876
    %878 = vmax.xlane.f32.xlu0 %v800
    %v879 = vpop.xlane.xlu0 %878
    %880 = vmax.xlane.f32.xlu0 %v803
    %v881 = vpop.xlane.xlu0 %880
    %882 = vmax.xlane.f32.xlu0 %v808
    %v883 = vpop.xlane.xlu0 %882
    %884 = vmax.xlane.f32.xlu0 %v811
    %v885 = vpop.xlane.xlu0 %884
    %886 = vmax.xlane.f32.xlu0 %v816
    %v887 = vpop.xlane.xlu0 %886
    %888 = vmax.xlane.f32.xlu0 %v819
    %v889 = vpop.xlane.xlu0 %888
    %890 = vmax.xlane.f32.xlu0 %v824
    %v891 = vpop.xlane.xlu0 %890
    %892 = vmax.xlane.f32.xlu0 %v827
    %v893 = vpop.xlane.xlu0 %892
    %v894 = vsub.f32 %v704, %v831
    %v895 = vsub.f32 %v707, %v833
    %v896 = vsub.f32 %v712, %v835
    %v897 = vsub.f32 %v715, %v837
    %v898 = vsub.f32 %v720, %v839
    %v899 = vsub.f32 %v723, %v841
    %v900 = vsub.f32 %v728, %v843
    %v901 = vsub.f32 %v731, %v845
    %v902 = vsub.f32 %v736, %v847
    %v903 = vsub.f32 %v739, %v849
    %v904 = vsub.f32 %v744, %v851
    %v905 = vsub.f32 %v747, %v853
    %v906 = vsub.f32 %v752, %v855
    %v907 = vsub.f32 %v755, %v857
    %v908 = vsub.f32 %v760, %v859
    %v909 = vsub.f32 %v763, %v861
    %v910 = vsub.f32 %v768, %v863
    %v911 = vsub.f32 %v771, %v865
    %v912 = vsub.f32 %v776, %v867
    %v913 = vsub.f32 %v779, %v869
    %v914 = vsub.f32 %v784, %v871
    %v915 = vsub.f32 %v787, %v873
    %v916 = vsub.f32 %v792, %v875
    %v917 = vsub.f32 %v795, %v877
    %v918 = vsub.f32 %v800, %v879
    %v919 = vsub.f32 %v803, %v881
    %v920 = vsub.f32 %v808, %v883
    %v921 = vsub.f32 %v811, %v885
    %v922 = vsub.f32 %v816, %v887
    %v923 = vsub.f32 %v819, %v889
    %v924 = vsub.f32 %v824, %v891
    %v925 = vsub.f32 %v827, %v893
    %v926 = vmul.f32 %v894, 1.442695
    %v927 = vpow.pop %v926
    %v928 = vmul.f32 %v895, 1.442695
    %v929 = vpow.pop %v928
    %v930 = vmul.f32 %v896, 1.442695
    %v931 = vpow.pop %v930
    %v932 = vmul.f32 %v897, 1.442695
    %v933 = vpow.pop %v932
    %v934 = vmul.f32 %v898, 1.442695
    %v935 = vpow.pop %v934
    %v936 = vmul.f32 %v899, 1.442695
    %v937 = vpow.pop %v936
    %v938 = vmul.f32 %v900, 1.442695
    %v939 = vpow.pop %v938
    %v940 = vmul.f32 %v901, 1.442695
    %v941 = vpow.pop %v940
    %v942 = vmul.f32 %v902, 1.442695
    %v943 = vpow.pop %v942
    %v944 = vmul.f32 %v903, 1.442695
    %v945 = vpow.pop %v944
    %v946 = vmul.f32 %v904, 1.442695
    %v947 = vpow.pop %v946
    %v948 = vmul.f32 %v905, 1.442695
    %v949 = vpow.pop %v948
    %v950 = vmul.f32 %v906, 1.442695
    %v951 = vpow.pop %v950
    %v952 = vmul.f32 %v907, 1.442695
    %v953 = vpow.pop %v952
    %v954 = vmul.f32 %v908, 1.442695
    %v955 = vpow.pop %v954
    %v956 = vmul.f32 %v909, 1.442695
    %v957 = vpow.pop %v956
    %v958 = vmul.f32 %v910, 1.442695
    %v959 = vpow.pop %v958
    %v960 = vmul.f32 %v911, 1.442695
    %v961 = vpow.pop %v960
    %v962 = vmul.f32 %v912, 1.442695
    %v963 = vpow.pop %v962
    %v964 = vmul.f32 %v913, 1.442695
    %v965 = vpow.pop %v964
    %v966 = vmul.f32 %v914, 1.442695
    %v967 = vpow.pop %v966
    %v968 = vmul.f32 %v915, 1.442695
    %v969 = vpow.pop %v968
    %v970 = vmul.f32 %v916, 1.442695
    %v971 = vpow.pop %v970
    %v972 = vmul.f32 %v917, 1.442695
    %v973 = vpow.pop %v972
    %v974 = vmul.f32 %v918, 1.442695
    %v975 = vpow.pop %v974
    %v976 = vmul.f32 %v919, 1.442695
    %v977 = vpow.pop %v976
    %v978 = vmul.f32 %v920, 1.442695
    %v979 = vpow.pop %v978
    %v980 = vmul.f32 %v921, 1.442695
    %v981 = vpow.pop %v980
    %v982 = vmul.f32 %v922, 1.442695
    %v983 = vpow.pop %v982
    %v984 = vmul.f32 %v923, 1.442695
    %v985 = vpow.pop %v984
    %v986 = vmul.f32 %v924, 1.442695
    %v987 = vpow.pop %v986
    %v988 = vmul.f32 %v925, 1.442695
    %v989 = vpow.pop %v988
    %990 = vadd.xlane.f32.xlu0 %v927
    %v991 = vpop.xlane.xlu0 %990
    %992 = vadd.xlane.f32.xlu0 %v929
    %v993 = vpop.xlane.xlu0 %992
    %994 = vadd.xlane.f32.xlu0 %v931
    %v995 = vpop.xlane.xlu0 %994
    %996 = vadd.xlane.f32.xlu0 %v933
    %v997 = vpop.xlane.xlu0 %996
    %998 = vadd.xlane.f32.xlu0 %v935
    %v999 = vpop.xlane.xlu0 %998
    %1000 = vadd.xlane.f32.xlu0 %v937
    %v1001 = vpop.xlane.xlu0 %1000
    %1002 = vadd.xlane.f32.xlu0 %v939
    %v1003 = vpop.xlane.xlu0 %1002
    %1004 = vadd.xlane.f32.xlu0 %v941
    %v1005 = vpop.xlane.xlu0 %1004
    %1006 = vadd.xlane.f32.xlu0 %v943
    %v1007 = vpop.xlane.xlu0 %1006
    %1008 = vadd.xlane.f32.xlu0 %v945
    %v1009 = vpop.xlane.xlu0 %1008
    %1010 = vadd.xlane.f32.xlu0 %v947
    %v1011 = vpop.xlane.xlu0 %1010
    %1012 = vadd.xlane.f32.xlu0 %v949
    %v1013 = vpop.xlane.xlu0 %1012
    %1014 = vadd.xlane.f32.xlu0 %v951
    %v1015 = vpop.xlane.xlu0 %1014
    %1016 = vadd.xlane.f32.xlu0 %v953
    %v1017 = vpop.xlane.xlu0 %1016
    %1018 = vadd.xlane.f32.xlu0 %v955
    %v1019 = vpop.xlane.xlu0 %1018
    %1020 = vadd.xlane.f32.xlu0 %v957
    %v1021 = vpop.xlane.xlu0 %1020
    %1022 = vadd.xlane.f32.xlu0 %v959
    %v1023 = vpop.xlane.xlu0 %1022
    %1024 = vadd.xlane.f32.xlu0 %v961
    %v1025 = vpop.xlane.xlu0 %1024
    %1026 = vadd.xlane.f32.xlu0 %v963
    %v1027 = vpop.xlane.xlu0 %1026
    %1028 = vadd.xlane.f32.xlu0 %v965
    %v1029 = vpop.xlane.xlu0 %1028
    %1030 = vadd.xlane.f32.xlu0 %v967
    %v1031 = vpop.xlane.xlu0 %1030
    %1032 = vadd.xlane.f32.xlu0 %v969
    %v1033 = vpop.xlane.xlu0 %1032
    %1034 = vadd.xlane.f32.xlu0 %v971
    %v1035 = vpop.xlane.xlu0 %1034
    %1036 = vadd.xlane.f32.xlu0 %v973
    %v1037 = vpop.xlane.xlu0 %1036
    %1038 = vadd.xlane.f32.xlu0 %v975
    %v1039 = vpop.xlane.xlu0 %1038
    %1040 = vadd.xlane.f32.xlu0 %v977
    %v1041 = vpop.xlane.xlu0 %1040
    %1042 = vadd.xlane.f32.xlu0 %v979
    %v1043 = vpop.xlane.xlu0 %1042
    %1044 = vadd.xlane.f32.xlu0 %v981
    %v1045 = vpop.xlane.xlu0 %1044
    %1046 = vadd.xlane.f32.xlu0 %v983
    %v1047 = vpop.xlane.xlu0 %1046
    %1048 = vadd.xlane.f32.xlu0 %v985
    %v1049 = vpop.xlane.xlu0 %1048
    %1050 = vadd.xlane.f32.xlu0 %v987
    %v1051 = vpop.xlane.xlu0 %1050
    %1052 = vadd.xlane.f32.xlu0 %v989
    %v1053 = vpop.xlane.xlu0 %1052
    %v1054 = vrcp.pop %v991
    %v1055 = vrcp.pop %v993
    %v1056 = vrcp.pop %v995
    %v1057 = vrcp.pop %v997
    %v1058 = vrcp.pop %v999
    %v1059 = vrcp.pop %v1001
    %v1060 = vrcp.pop %v1003
    %v1061 = vrcp.pop %v1005
    %v1062 = vrcp.pop %v1007
    %v1063 = vrcp.pop %v1009
    %v1064 = vrcp.pop %v1011
    %v1065 = vrcp.pop %v1013
    %v1066 = vrcp.pop %v1015
    %v1067 = vrcp.pop %v1017
    %v1068 = vrcp.pop %v1019
    %v1069 = vrcp.pop %v1021
    %v1070 = vrcp.pop %v1023
    %v1071 = vrcp.pop %v1025
    %v1072 = vrcp.pop %v1027
    %v1073 = vrcp.pop %v1029
    %v1074 = vrcp.pop %v1031
    %v1075 = vrcp.pop %v1033
    %v1076 = vrcp.pop %v1035
    %v1077 = vrcp.pop %v1037
    %v1078 = vrcp.pop %v1039
    %v1079 = vrcp.pop %v1041
    %v1080 = vrcp.pop %v1043
    %v1081 = vrcp.pop %v1045
    %v1082 = vrcp.pop %v1047
    %v1083 = vrcp.pop %v1049
    %v1084 = vrcp.pop %v1051
    %v1085 = vrcp.pop %v1053
    %v1086 = vmul.f32 %v927, %v1054
    %v1087 = vmul.f32 %v929, %v1055
    %v1088 = vmul.f32 %v931, %v1056
    %v1089 = vmul.f32 %v933, %v1057
    %v1090 = vmul.f32 %v935, %v1058
    %v1091 = vmul.f32 %v937, %v1059
    %v1092 = vmul.f32 %v939, %v1060
    %v1093 = vmul.f32 %v941, %v1061
    %v1094 = vmul.f32 %v943, %v1062
    %v1095 = vmul.f32 %v945, %v1063
    %v1096 = vmul.f32 %v947, %v1064
    %v1097 = vmul.f32 %v949, %v1065
    %v1098 = vmul.f32 %v951, %v1066
    %v1099 = vmul.f32 %v953, %v1067
    %v1100 = vmul.f32 %v955, %v1068
    %v1101 = vmul.f32 %v957, %v1069
    %v1102 = vmul.f32 %v959, %v1070
    %v1103 = vmul.f32 %v961, %v1071
    %v1104 = vmul.f32 %v963, %v1072
    %v1105 = vmul.f32 %v965, %v1073
    %v1106 = vmul.f32 %v967, %v1074
    %v1107 = vmul.f32 %v969, %v1075
    %v1108 = vmul.f32 %v971, %v1076
    %v1109 = vmul.f32 %v973, %v1077
    %v1110 = vmul.f32 %v975, %v1078
    %v1111 = vmul.f32 %v977, %v1079
    %v1112 = vmul.f32 %v979, %v1080
    %v1113 = vmul.f32 %v981, %v1081
    %v1114 = vmul.f32 %v983, %v1082
    %v1115 = vmul.f32 %v985, %v1083
    %v1116 = vmul.f32 %v987, %v1084
    %v1117 = vmul.f32 %v989, %v1085
    %vm1118 = vcmask 80896
    %1119 = vst.msk [vmem:[%s5] sm:$0xff] %vm1118, %v1086
    %1120 = vst.msk [vmem:[%s5 + $0x8] sm:$0xff] %vm1118, %v1087
    %1121 = vst.msk [vmem:[%s5 + $0x10] sm:$0xff] %vm1118, %v1088
    %1122 = vst.msk [vmem:[%s5 + $0x18] sm:$0xff] %vm1118, %v1089
    %1123 = vst.msk [vmem:[%s5 + $0x20] sm:$0xff] %vm1118, %v1090
    %1124 = vst.msk [vmem:[%s5 + $0x28] sm:$0xff] %vm1118, %v1091
    %1125 = vst.msk [vmem:[%s5 + $0x30] sm:$0xff] %vm1118, %v1092
    %1126 = vst.msk [vmem:[%s5 + $0x38] sm:$0xff] %vm1118, %v1093
    %1127 = vst.msk [vmem:[%s5 + $0x40] sm:$0xff] %vm1118, %v1094
    %1128 = vst.msk [vmem:[%s5 + $0x48] sm:$0xff] %vm1118, %v1095
    %1129 = vst.msk [vmem:[%s5 + $0x50] sm:$0xff] %vm1118, %v1096
    %1130 = vst.msk [vmem:[%s5 + $0x58] sm:$0xff] %vm1118, %v1097
    %1131 = vst.msk [vmem:[%s5 + $0x60] sm:$0xff] %vm1118, %v1098
    %1132 = vst.msk [vmem:[%s5 + $0x68] sm:$0xff] %vm1118, %v1099
    %1133 = vst.msk [vmem:[%s5 + $0x70] sm:$0xff] %vm1118, %v1100
    %1134 = vst.msk [vmem:[%s5 + $0x78] sm:$0xff] %vm1118, %v1101
    %1135 = vst.msk [vmem:[%s5 + $0x80] sm:$0xff] %vm1118, %v1102
    %1136 = vst.msk [vmem:[%s5 + $0x88] sm:$0xff] %vm1118, %v1103
    %1137 = vst.msk [vmem:[%s5 + $0x90] sm:$0xff] %vm1118, %v1104
    %1138 = vst.msk [vmem:[%s5 + $0x98] sm:$0xff] %vm1118, %v1105
    %1139 = vst.msk [vmem:[%s5 + $0xa0] sm:$0xff] %vm1118, %v1106
    %1140 = vst.msk [vmem:[%s5 + $0xa8] sm:$0xff] %vm1118, %v1107
    %1141 = vst.msk [vmem:[%s5 + $0xb0] sm:$0xff] %vm1118, %v1108
    %1142 = vst.msk [vmem:[%s5 + $0xb8] sm:$0xff] %vm1118, %v1109
    %1143 = vst.msk [vmem:[%s5 + $0xc0] sm:$0xff] %vm1118, %v1110
    %1144 = vst.msk [vmem:[%s5 + $0xc8] sm:$0xff] %vm1118, %v1111
    %1145 = vst.msk [vmem:[%s5 + $0xd0] sm:$0xff] %vm1118, %v1112
    %1146 = vst.msk [vmem:[%s5 + $0xd8] sm:$0xff] %vm1118, %v1113
    %1147 = vst.msk [vmem:[%s5 + $0xe0] sm:$0xff] %vm1118, %v1114
    %1148 = vst.msk [vmem:[%s5 + $0xe8] sm:$0xff] %vm1118, %v1115
    %1149 = vst.msk [vmem:[%s5 + $0xf0] sm:$0xff] %vm1118, %v1116
    %1150 = vst.msk [vmem:[%s5 + $0xf8] sm:$0xff] %vm1118, %v1117
    // Predicated region
    $region34: #{tpu_custom_call.1} parent=1 // pred_check
      _
    $region35: #{tpu_custom_call.1} parent=1 // pred_check_branch
      %1152 = sbr.rel (0) target = $region37
    $region36: #{tpu_custom_call.1} parent=1 // pred_region
      _
    $region37: #{tpu_custom_call.1} parent=1 // pred_fallthru
      _
    // Predicated region
    $region38: #{tpu_custom_call.1} parent=1 // pred_check
      _
    $region39: #{tpu_custom_call.1} parent=1 // pred_check_branch
      %1154 = sbr.rel (0) target = $region41
    $region40: #{tpu_custom_call.1} parent=1 // pred_region
      _
    $region41: #{tpu_custom_call.1} parent=1 // pred_fallthru
      _
    %1155 = vsyncpa [#allocation3], 1
    %1156 = vsyncpa [#allocation5], 1

</llo_original>
